<compile_context>
chip_gen: v7x
topology: tpu7x:2x2x1
jax: 0.10.0
libtpu: 0.0.40
codegen_flags: <defaults>
</compile_context>

<pallas_src>
import functools

import jax
import jax.numpy as jnp
from jax import lax
from jax.experimental import pallas as pl
from jax.experimental.pallas import tpu as pltpu


def _round_up(x, m):
    return ((x + m - 1) // m) * m


def _tensorcores_per_chip():
    """Best-effort TensorCores-per-chip (2 on v7x-class megacore, else 1)."""
    try:
        dev = jax.devices()[0]
        if getattr(dev, "platform", "") != "tpu":
            return 1
        v = getattr(dev, "num_cores", None)
        if isinstance(v, int) and v > 0:
            return min(v, 2)
    except Exception:
        pass
    try:
        info = pltpu.get_tpu_info()
        for name in ("num_cores", "tensorcores_per_chip", "num_tensorcores",
                     "core_count"):
            v = getattr(info, name, None)
            if isinstance(v, int) and v > 0:
                return min(v, 2)
    except Exception:
        pass
    return 1


def _focal_pow(base, gamma):
    """(max(base, 0)) ** gamma with static specialization of gamma."""
    base = jnp.maximum(base, 0.0)  # guard tiny negatives from approx reciprocal
    g = float(gamma)
    if g == 0.0:
        return jnp.ones_like(base)
    if g == 0.5:
        return jnp.sqrt(base)
    if g == 1.0:
        return base
    if g == 2.0:
        return base * base
    if g == float(int(g)) and g > 0:
        return lax.integer_pow(base, int(g))
    return jnp.power(base, g)


def _nfl_mae_kernel(x_ref, t_ref, out_ref, cls_ref, col_ref, acc_nfl, acc_mae, *,
                    gamma, nfl_scale, mae_scale, n_rows, tile_n, tiles_per_shard,
                    num_classes):
    s = pl.program_id(0)      # shard axis (CORE_PARALLEL on 2-TC chips)
    i = pl.program_id(1)      # "arbitrary" reduction axis over batch tiles
    n_i = pl.num_programs(1)
    tile_start = (s * tiles_per_shard + i) * tile_n

    @pl.when(i == 0)
    def _init():
        acc_nfl[...] = jnp.zeros(acc_nfl.shape, acc_nfl.dtype)
        acc_mae[...] = jnp.zeros(acc_mae.shape, acc_mae.dtype)
        # Hoisted constants: built once per shard, reused every grid step.
        cls_ref[...] = lax.broadcasted_iota(jnp.int32, cls_ref.shape, 0)
        col_ref[...] = lax.broadcasted_iota(jnp.int32, col_ref.shape, 1)

    @pl.when(tile_start < n_rows)          # skip fully-padded (duplicate) tiles
    def _body():
        x = x_ref[...].astype(jnp.float32)   # (C, T): classes on sublanes, batch on lanes
        t = t_ref[...]                        # (1, T) int32 target ids

        # softmax statistics over the class (sublane) axis
        m = jnp.max(x, axis=0, keepdims=True)          # (1, T)
        z = x - m                                      # (C, T)
        e = jnp.exp(z)                                 # (C, T) -- the only full-plane exp
        sum_e = jnp.sum(e, axis=0, keepdims=True)      # (1, T)
        log_sum = jnp.log(sum_e)                       # (1, T)
        inv_sum = pl.reciprocal(sum_e, approx=True)    # (1, T)

        # gather z and e at the target class via one-hot select over sublanes
        onehot = cls_ref[...] == t                     # (C, T) bool
        z_t = jnp.sum(jnp.where(onehot, z, 0.0), axis=0, keepdims=True)
        e_t = jnp.sum(jnp.where(onehot, e, 0.0), axis=0, keepdims=True)
        pt = e_t * inv_sum                             # prob at target: no extra exp
        logpt_t = z_t - log_sum                        # (1, T)

        if float(gamma) == 0.0:
            # sum_c -logpt_c == C*log_sum - sum_c z_c : no focal planes at all.
            normalizor = num_classes * log_sum - jnp.sum(z, axis=0, keepdims=True)
            nfl_num = -logpt_t
        else:
            p = e * inv_sum                            # (C, T) softmax probs
            w = _focal_pow(1.0 - p, gamma)             # (C, T) focal weights
            # sum_c -(w*logpt) == log_sum*sum_c w - sum_c (w*z): no (C,T) logpt plane.
            normalizor = (log_sum * jnp.sum(w, axis=0, keepdims=True)
                          - jnp.sum(w * z, axis=0, keepdims=True))
            nfl_num = -(_focal_pow(1.0 - pt, gamma) * logpt_t)

        nfl_row = nfl_num * pl.reciprocal(normalizor, approx=True)   # (1, T)
        mae_row = 1.0 - pt                                           # (1, T)

        # mask columns past the true batch size (ragged last tile / clamped tiles)
        valid = col_ref[...] < (n_rows - tile_start)
        acc_nfl[...] += jnp.where(valid, nfl_row, 0.0)
        acc_mae[...] += jnp.where(valid, mae_row, 0.0)

    @pl.when(i == n_i - 1)
    def _finalize():
        s_nfl = jnp.sum(acc_nfl[...], axis=1, keepdims=True)   # (1, 1)
        s_mae = jnp.sum(acc_mae[...], axis=1, keepdims=True)   # (1, 1)
        # scale and 1/N folded into this single scalar write per shard.
        out_ref[...] = nfl_scale * s_nfl + mae_scale * s_mae


def nfl_and_mae(pred, labels, *, alpha=1.0, beta=1.0, num_classes=None, gamma=0.5,
                size_average=True, tile_n=32768, num_shards=None, pred_layout="nc"):
    """Fused Pallas implementation of NFLandMAE.forward == NFL(pred, labels) + MAE(pred, labels)."""
    pred = jnp.asarray(pred)
    labels = jnp.asarray(labels)

    if pred_layout == "cn":
        x_t = pred                       # already (C, N): zero wrapper-side HBM passes
        c, n = x_t.shape
    else:
        n, c = pred.shape
        x_t = pred.T                     # single transpose pass; dtype kept, upcast in-kernel
    if num_classes is None:
        num_classes = c
    assert c == num_classes, "pred must be (N, num_classes) (or (num_classes, N) with pred_layout='cn')"
    t = labels.astype(jnp.int32).reshape(1, n)

    # Batch tile: MiB-scale DMA bursts, 512-column floor, multiple of 128 lanes.
    tile = _round_up(max(512, min(int(tile_n), 65536)), 128)
    if tile >= n:
        tile = n                         # single full-extent block (legal for any n)
    total_tiles = -(-n // tile)

    if num_shards is None:
        num_shards = _tensorcores_per_chip()
    num_shards = max(1, min(int(num_shards), total_tiles))
    tiles_per_shard = -(-total_tiles // num_shards)
    max_block = total_tiles - 1

    nfl_scale = float(alpha) / n if size_average else float(alpha)
    mae_scale = float(beta) / n          # MAE is always a mean

    kernel = functools.partial(
        _nfl_mae_kernel, gamma=gamma, nfl_scale=nfl_scale, mae_scale=mae_scale,
        n_rows=n, tile_n=tile, tiles_per_shard=tiles_per_shard, num_classes=c)

    def block_map(s, i):
        # Clamp so duplicate tiles of an imbalanced shard never DMA out of bounds;
        # their compute is skipped in-kernel via pl.when(tile_start < n_rows).
        return (0, jnp.minimum(s * tiles_per_shard + i, max_block))

    itemsize = jnp.dtype(x_t.dtype).itemsize
    cost = pl.CostEstimate(
        flops=16 * n * c,
        transcendentals=n * (2 * c + 4),
        bytes_accessed=n * c * itemsize + n * 4 + num_shards * 4)

    lead_sem = (getattr(pltpu, "CORE_PARALLEL", "parallel")
                if num_shards > 1 else "arbitrary")

    partials = pl.pallas_call(
        kernel,
        out_shape=jax.ShapeDtypeStruct((num_shards, 1, 1), jnp.float32),
        grid=(num_shards, tiles_per_shard),
        in_specs=[
            pl.BlockSpec((c, tile), block_map),
            pl.BlockSpec((1, tile), block_map),
        ],
        out_specs=pl.BlockSpec((None, 1, 1), lambda s, i: (s, 0, 0)),
        scratch_shapes=[
            pltpu.VMEM((c, tile), jnp.int32),     # class-id iota (hoisted)
            pltpu.VMEM((1, tile), jnp.int32),     # column-id iota (hoisted)
            pltpu.VMEM((1, tile), jnp.float32),   # NFL accumulator
            pltpu.VMEM((1, tile), jnp.float32),   # MAE accumulator
        ],
        compiler_params=pltpu.CompilerParams(
            dimension_semantics=(lead_sem, "arbitrary")),
        cost_estimate=cost,
    )(x_t, t)

    # Sum the per-shard (already scaled) partials -> the module's scalar output.
    return jnp.sum(partials)


def _reference(pred, labels, *, alpha, beta, num_classes, gamma, size_average=True):
    """Pure-JAX reference mirroring the PyTorch NFLandMAE forward."""
    x = pred.astype(jnp.float32)
    logpt = jax.nn.log_softmax(x, axis=1)
    pt_all = jnp.exp(logpt)
    normalizor = jnp.sum(-1.0 * (1.0 - pt_all) ** gamma * logpt, axis=1)
    lt = jnp.take_along_axis(logpt, labels.reshape(-1, 1).astype(jnp.int32),
                             axis=1).reshape(-1)
    pt = jnp.exp(lt)
    nfl = -1.0 * (1.0 - pt) ** gamma * lt
    nfl = alpha * nfl / normalizor
    nfl = jnp.mean(nfl) if size_average else jnp.sum(nfl)
    probs = jax.nn.softmax(x, axis=1)
    one_hot = jax.nn.one_hot(labels, num_classes, dtype=jnp.float32)
    mae = 1.0 - jnp.sum(one_hot * probs, axis=1)
    return nfl + beta * jnp.mean(mae)


if __name__ == "__main__":
    key = jax.random.PRNGKey(0)
    k1, k2, k3, k4 = jax.random.split(key, 4)

    C = 10  # num_classes (module default)

    # Config 1: NFLandMAE(alpha=1.0, beta=1.0, num_classes=10), default gamma=0.5.
    N = 8
    pred = jax.random.normal(k1, (N, C), dtype=jnp.float32)
    labels = jax.random.randint(k2, (N,), 0, C, dtype=jnp.int32)
    out = jax.block_until_ready(
        nfl_and_mae(pred, labels, alpha=1.0, beta=1.0, num_classes=C, gamma=0.5))
    ref = _reference(pred, labels, alpha=1.0, beta=1.0, num_classes=C, gamma=0.5)
    assert jnp.allclose(out, ref, rtol=1e-2, atol=1e-5), (out, ref)

    # Same config with logits supplied pre-transposed (C, N): zero wrapper HBM passes.
    out_cn = jax.block_until_ready(
        nfl_and_mae(pred.T, labels, alpha=1.0, beta=1.0, num_classes=C, gamma=0.5,
                    pred_layout="cn"))
    assert jnp.allclose(out_cn, ref, rtol=1e-2, atol=1e-5), (out_cn, ref)

    # Config 2: multi-tile grid with a ragged (masked) last tile, gamma=2 specialization.
    N2 = 1500
    pred2 = jax.random.normal(k3, (N2, C), dtype=jnp.float32)
    labels2 = jax.random.randint(k4, (N2,), 0, C, dtype=jnp.int32)
    out2 = jax.block_until_ready(
        nfl_and_mae(pred2, labels2, alpha=0.5, beta=2.0, num_classes=C, gamma=2,
                    tile_n=512))
    ref2 = _reference(pred2, labels2, alpha=0.5, beta=2.0, num_classes=C, gamma=2)
    assert jnp.allclose(out2, ref2, rtol=1e-2, atol=1e-5), (out2, ref2)

    # Config 3: gamma == 0 static specialization (no focal planes at all).
    out3 = jax.block_until_ready(
        nfl_and_mae(pred, labels, alpha=2.0, beta=0.5, num_classes=C, gamma=0))
    ref3 = _reference(pred, labels, alpha=2.0, beta=0.5, num_classes=C, gamma=0)
    assert jnp.allclose(out3, ref3, rtol=1e-2, atol=1e-5), (out3, ref3)

    print("KERNEL_OK")
</pallas_src>

<mosaic_0001>
module attributes {stable_mosaic.version = 11 : i64} {
  func.func @_nfl_mae_kernel(%arg0: i32, %arg1: i32, %arg2: memref<10x8xf32, #tpu.memory_space<vmem>>, %arg3: memref<1x8xi32, #tpu.memory_space<vmem>>, %arg4: memref<1x1x1xf32, #tpu.memory_space<vmem>>, %arg5: memref<10x8xi32, #tpu.memory_space<vmem>>, %arg6: memref<1x8xi32, #tpu.memory_space<vmem>>, %arg7: memref<1x8xf32, #tpu.memory_space<vmem>>, %arg8: memref<1x8xf32, #tpu.memory_space<vmem>>) attributes {dimension_semantics = [#tpu.dimension_semantics<arbitrary>, #tpu.dimension_semantics<arbitrary>], iteration_bounds = array<i64: 1, 1>, scalar_prefetch = 0 : i64, scratch_operands = 4 : i64, tpu.core_type = #tpu.core_type<tc>, window_params = [{transform_indices = @transform_0, window_bounds = array<i64: 10, 8>}, {transform_indices = @transform_1, window_bounds = array<i64: 1, 8>}, {transform_indices = @transform_2, window_bounds = array<i64: 1, 1, 1>}]} {
    %c1_i32 = arith.constant 1 : i32
    %0 = arith.muli %arg0, %c1_i32 : i32
    %1 = arith.addi %0, %arg1 : i32
    %c8_i32 = arith.constant 8 : i32
    %2 = arith.muli %1, %c8_i32 : i32
    %c0_i32 = arith.constant 0 : i32
    %3 = arith.cmpi eq, %arg1, %c0_i32 : i32
    %4 = arith.extui %3 : i1 to i32
    %c0_i32_0 = arith.constant 0 : i32
    %5 = arith.cmpi ne, %4, %c0_i32_0 : i32
    scf.if %5 {
      %cst = arith.constant 0.000000e+00 : f32
      %12 = vector.broadcast %cst : f32 to vector<1x8xf32>
      %c0 = arith.constant 0 : index
      %c0_5 = arith.constant 0 : index
      %13 = vector.load %arg7[%c0, %c0_5] : memref<1x8xf32, #tpu.memory_space<vmem>>, vector<1x8xf32>
      tpu.vector_store %arg7[%c0, %c0_5], %12 {strides = array<i32>} : memref<1x8xf32, #tpu.memory_space<vmem>>, vector<1x8xf32>,
      %cst_6 = arith.constant 0.000000e+00 : f32
      %14 = vector.broadcast %cst_6 : f32 to vector<1x8xf32>
      %c0_7 = arith.constant 0 : index
      %c0_8 = arith.constant 0 : index
      %15 = vector.load %arg8[%c0_7, %c0_8] : memref<1x8xf32, #tpu.memory_space<vmem>>, vector<1x8xf32>
      tpu.vector_store %arg8[%c0_7, %c0_8], %14 {strides = array<i32>} : memref<1x8xf32, #tpu.memory_space<vmem>>, vector<1x8xf32>,
      %16 = tpu.iota {dimensions = array<i32: 0>} : vector<10x8xi32>
      %c0_9 = arith.constant 0 : index
      %c0_10 = arith.constant 0 : index
      %17 = vector.load %arg5[%c0_9, %c0_10] : memref<10x8xi32, #tpu.memory_space<vmem>>, vector<10x8xi32>
      tpu.vector_store %arg5[%c0_9, %c0_10], %16 {strides = array<i32>} : memref<10x8xi32, #tpu.memory_space<vmem>>, vector<10x8xi32>,
      %18 = tpu.iota {dimensions = array<i32: 1>} : vector<1x8xi32>
      %c0_11 = arith.constant 0 : index
      %c0_12 = arith.constant 0 : index
      %19 = vector.load %arg6[%c0_11, %c0_12] : memref<1x8xi32, #tpu.memory_space<vmem>>, vector<1x8xi32>
      tpu.vector_store %arg6[%c0_11, %c0_12], %18 {strides = array<i32>} : memref<1x8xi32, #tpu.memory_space<vmem>>, vector<1x8xi32>,
    } else {
    }
    %c8_i32_1 = arith.constant 8 : i32
    %6 = arith.cmpi slt, %2, %c8_i32_1 : i32
    %7 = arith.extui %6 : i1 to i32
    %c0_i32_2 = arith.constant 0 : i32
    %8 = arith.cmpi ne, %7, %c0_i32_2 : i32
    scf.if %8 {
      %c0 = arith.constant 0 : index
      %c0_5 = arith.constant 0 : index
      %12 = vector.load %arg2[%c0, %c0_5] : memref<10x8xf32, #tpu.memory_space<vmem>>, vector<10x8xf32>
      %c0_6 = arith.constant 0 : index
      %c0_7 = arith.constant 0 : index
      %13 = vector.load %arg3[%c0_6, %c0_7] : memref<1x8xi32, #tpu.memory_space<vmem>>, vector<1x8xi32>
      %cst = arith.constant dense<0xFF800000> : vector<8xf32>
      %14 = vector.multi_reduction <maximumf>, %12, %cst [0] : vector<10x8xf32> to vector<8xf32>
      %15 = vector.shape_cast %14 : vector<8xf32> to vector<1x8xf32>
      %16 = vector.broadcast %15 : vector<1x8xf32> to vector<10x8xf32>
      %17 = arith.subf %12, %16 : vector<10x8xf32>
      %18 = math.exp %17 : vector<10x8xf32>
      %cst_8 = arith.constant dense<0.000000e+00> : vector<8xf32>
      %19 = vector.multi_reduction <add>, %18, %cst_8 [0] : vector<10x8xf32> to vector<8xf32>
      %20 = vector.shape_cast %19 : vector<8xf32> to vector<1x8xf32>
      %21 = math.log %20 : vector<1x8xf32>
      %22 = tpu.reciprocal %20 {approx = true} : vector<1x8xf32> -> vector<1x8xf32>
      %c0_9 = arith.constant 0 : index
      %c0_10 = arith.constant 0 : index
      %23 = vector.load %arg5[%c0_9, %c0_10] : memref<10x8xi32, #tpu.memory_space<vmem>>, vector<10x8xi32>
      %24 = vector.broadcast %13 : vector<1x8xi32> to vector<10x8xi32>
      %25 = arith.cmpi eq, %23, %24 : vector<10x8xi32>
      %cst_11 = arith.constant 0.000000e+00 : f32
      %26 = vector.broadcast %cst_11 : f32 to vector<10x8xf32>
      %27 = arith.select %25, %17, %26 : vector<10x8xi1>, vector<10x8xf32>
      %cst_12 = arith.constant dense<0.000000e+00> : vector<8xf32>
      %28 = vector.multi_reduction <add>, %27, %cst_12 [0] : vector<10x8xf32> to vector<8xf32>
      %29 = vector.shape_cast %28 : vector<8xf32> to vector<1x8xf32>
      %cst_13 = arith.constant 0.000000e+00 : f32
      %30 = vector.broadcast %cst_13 : f32 to vector<10x8xf32>
      %31 = arith.select %25, %18, %30 : vector<10x8xi1>, vector<10x8xf32>
      %cst_14 = arith.constant dense<0.000000e+00> : vector<8xf32>
      %32 = vector.multi_reduction <add>, %31, %cst_14 [0] : vector<10x8xf32> to vector<8xf32>
      %33 = vector.shape_cast %32 : vector<8xf32> to vector<1x8xf32>
      %34 = arith.mulf %33, %22 : vector<1x8xf32>
      %35 = arith.subf %29, %21 : vector<1x8xf32>
      %36 = vector.broadcast %22 : vector<1x8xf32> to vector<10x8xf32>
      %37 = arith.mulf %18, %36 : vector<10x8xf32>
      %cst_15 = arith.constant 1.000000e+00 : f32
      %38 = vector.broadcast %cst_15 : f32 to vector<10x8xf32>
      %39 = arith.subf %38, %37 : vector<10x8xf32>
      %cst_16 = arith.constant 0.000000e+00 : f32
      %40 = vector.broadcast %cst_16 : f32 to vector<10x8xf32>
      %41 = arith.maximumf %39, %40 : vector<10x8xf32>
      %42 = math.sqrt %41 : vector<10x8xf32>
      %cst_17 = arith.constant dense<0.000000e+00> : vector<8xf32>
      %43 = vector.multi_reduction <add>, %42, %cst_17 [0] : vector<10x8xf32> to vector<8xf32>
      %44 = vector.shape_cast %43 : vector<8xf32> to vector<1x8xf32>
      %45 = arith.mulf %21, %44 : vector<1x8xf32>
      %46 = arith.mulf %42, %17 : vector<10x8xf32>
      %cst_18 = arith.constant dense<0.000000e+00> : vector<8xf32>
      %47 = vector.multi_reduction <add>, %46, %cst_18 [0] : vector<10x8xf32> to vector<8xf32>
      %48 = vector.shape_cast %47 : vector<8xf32> to vector<1x8xf32>
      %49 = arith.subf %45, %48 : vector<1x8xf32>
      %cst_19 = arith.constant 1.000000e+00 : f32
      %50 = vector.broadcast %cst_19 : f32 to vector<1x8xf32>
      %51 = arith.subf %50, %34 : vector<1x8xf32>
      %cst_20 = arith.constant 0.000000e+00 : f32
      %52 = vector.broadcast %cst_20 : f32 to vector<1x8xf32>
      %53 = arith.maximumf %51, %52 : vector<1x8xf32>
      %54 = math.sqrt %53 : vector<1x8xf32>
      %55 = arith.mulf %54, %35 : vector<1x8xf32>
      %cst_21 = arith.constant 0.000000e+00 : f32
      %56 = vector.broadcast %cst_21 : f32 to vector<1x8xf32>
      %57 = arith.subf %56, %55 : vector<1x8xf32>
      %58 = tpu.reciprocal %49 {approx = true} : vector<1x8xf32> -> vector<1x8xf32>
      %59 = arith.mulf %57, %58 : vector<1x8xf32>
      %cst_22 = arith.constant 1.000000e+00 : f32
      %60 = vector.broadcast %cst_22 : f32 to vector<1x8xf32>
      %61 = arith.subf %60, %34 : vector<1x8xf32>
      %c0_23 = arith.constant 0 : index
      %c0_24 = arith.constant 0 : index
      %62 = vector.load %arg6[%c0_23, %c0_24] : memref<1x8xi32, #tpu.memory_space<vmem>>, vector<1x8xi32>
      %c8_i32_25 = arith.constant 8 : i32
      %63 = arith.subi %c8_i32_25, %2 : i32
      %64 = vector.broadcast %63 : i32 to vector<1x8xi32>
      %65 = arith.cmpi slt, %62, %64 : vector<1x8xi32>
      %c0_26 = arith.constant 0 : index
      %c0_27 = arith.constant 0 : index
      %66 = vector.load %arg7[%c0_26, %c0_27] : memref<1x8xf32, #tpu.memory_space<vmem>>, vector<1x8xf32>
      %cst_28 = arith.constant 0.000000e+00 : f32
      %67 = vector.broadcast %cst_28 : f32 to vector<1x8xf32>
      %68 = arith.select %65, %59, %67 : vector<1x8xi1>, vector<1x8xf32>
      %69 = arith.addf %66, %68 : vector<1x8xf32>
      %c0_29 = arith.constant 0 : index
      %c0_30 = arith.constant 0 : index
      %70 = vector.load %arg7[%c0_29, %c0_30] : memref<1x8xf32, #tpu.memory_space<vmem>>, vector<1x8xf32>
      tpu.vector_store %arg7[%c0_29, %c0_30], %69 {strides = array<i32>} : memref<1x8xf32, #tpu.memory_space<vmem>>, vector<1x8xf32>,
      %c0_31 = arith.constant 0 : index
      %c0_32 = arith.constant 0 : index
      %71 = vector.load %arg8[%c0_31, %c0_32] : memref<1x8xf32, #tpu.memory_space<vmem>>, vector<1x8xf32>
      %cst_33 = arith.constant 0.000000e+00 : f32
      %72 = vector.broadcast %cst_33 : f32 to vector<1x8xf32>
      %73 = arith.select %65, %61, %72 : vector<1x8xi1>, vector<1x8xf32>
      %74 = arith.addf %71, %73 : vector<1x8xf32>
      %c0_34 = arith.constant 0 : index
      %c0_35 = arith.constant 0 : index
      %75 = vector.load %arg8[%c0_34, %c0_35] : memref<1x8xf32, #tpu.memory_space<vmem>>, vector<1x8xf32>
      tpu.vector_store %arg8[%c0_34, %c0_35], %74 {strides = array<i32>} : memref<1x8xf32, #tpu.memory_space<vmem>>, vector<1x8xf32>,
    } else {
    }
    %c0_i32_3 = arith.constant 0 : i32
    %9 = arith.cmpi eq, %arg1, %c0_i32_3 : i32
    %10 = arith.extui %9 : i1 to i32
    %c0_i32_4 = arith.constant 0 : i32
    %11 = arith.cmpi ne, %10, %c0_i32_4 : i32
    scf.if %11 {
      %c0 = arith.constant 0 : index
      %c0_5 = arith.constant 0 : index
      %12 = vector.load %arg7[%c0, %c0_5] : memref<1x8xf32, #tpu.memory_space<vmem>>, vector<1x8xf32>
      %cst = arith.constant dense<0.000000e+00> : vector<1xf32>
      %13 = vector.multi_reduction <add>, %12, %cst [1] : vector<1x8xf32> to vector<1xf32>
      %14 = vector.shape_cast %13 : vector<1xf32> to vector<1x1xf32>
      %c0_6 = arith.constant 0 : index
      %c0_7 = arith.constant 0 : index
      %15 = vector.load %arg8[%c0_6, %c0_7] : memref<1x8xf32, #tpu.memory_space<vmem>>, vector<1x8xf32>
      %cst_8 = arith.constant dense<0.000000e+00> : vector<1xf32>
      %16 = vector.multi_reduction <add>, %15, %cst_8 [1] : vector<1x8xf32> to vector<1xf32>
      %17 = vector.shape_cast %16 : vector<1xf32> to vector<1x1xf32>
      %cst_9 = arith.constant 1.250000e-01 : f32
      %18 = vector.broadcast %cst_9 : f32 to vector<1x1xf32>
      %19 = arith.mulf %18, %14 : vector<1x1xf32>
      %cst_10 = arith.constant 1.250000e-01 : f32
      %20 = vector.broadcast %cst_10 : f32 to vector<1x1xf32>
      %21 = arith.mulf %20, %17 : vector<1x1xf32>
      %22 = arith.addf %19, %21 : vector<1x1xf32>
      %c0_11 = arith.constant 0 : index
      %c0_12 = arith.constant 0 : index
      %c0_13 = arith.constant 0 : index
      %23 = vector.load %arg4[%c0_11, %c0_12, %c0_13] : memref<1x1x1xf32, #tpu.memory_space<vmem>>, vector<1x1x1xf32>
      %24 = vector.shape_cast %23 : vector<1x1x1xf32> to vector<1x1xf32>
      %25 = vector.shape_cast %22 : vector<1x1xf32> to vector<1x1x1xf32>
      tpu.vector_store %arg4[%c0_11, %c0_12, %c0_13], %25 {strides = array<i32>} : memref<1x1x1xf32, #tpu.memory_space<vmem>>, vector<1x1x1xf32>,
    } else {
    }
    return
  }
  func.func @transform_0(%arg0: i32, %arg1: i32) -> (i32, i32) {
    %c1_i32 = arith.constant 1 : i32
    %0 = arith.muli %arg0, %c1_i32 : i32
    %1 = arith.addi %0, %arg1 : i32
    %c0_i32 = arith.constant 0 : i32
    %2 = arith.minsi %1, %c0_i32 : i32
    %c0_i32_0 = arith.constant 0 : i32
    %c0_i32_1 = arith.constant 0 : i32
    return %c0_i32_0, %2 : i32, i32
  }
  func.func @transform_1(%arg0: i32, %arg1: i32) -> (i32, i32) {
    %c1_i32 = arith.constant 1 : i32
    %0 = arith.muli %arg0, %c1_i32 : i32
    %1 = arith.addi %0, %arg1 : i32
    %c0_i32 = arith.constant 0 : i32
    %2 = arith.minsi %1, %c0_i32 : i32
    %c0_i32_0 = arith.constant 0 : i32
    %c0_i32_1 = arith.constant 0 : i32
    return %c0_i32_0, %2 : i32, i32
  }
  func.func @transform_2(%arg0: i32, %arg1: i32) -> (i32, i32, i32) {
    %c0_i32 = arith.constant 0 : i32
    %c0_i32_0 = arith.constant 0 : i32
    %c0_i32_1 = arith.constant 0 : i32
    return %arg0, %c0_i32, %c0_i32_0 : i32, i32, i32
  }
}

</mosaic_0001>

<llo_original>
// kernel: tpu_custom_call.1
$region0: #{tpu_custom_call.1}
  #allocation0 [shape = 'u32[]', space=smem, size = 0x4, offset = 0x4, fixed_abs, tag = 'smem constant byte address 0x4 - core index']
  #allocation1 [shape = 'u32[144,128]{1,0:T(1,128)}', space=vmem, size = 0x12000, scoped, tag = 'internal scratch']
  #allocation2 [shape = 's32[10,8]{1,0:T(8,128)}', space=vmem, size = 0x2000, scoped, tag = 'scratch operand']
  #allocation3 [shape = 's32[1,8]{1,0:T(1,128)}', space=vmem, size = 0x200, scoped, tag = 'scratch operand']
  #allocation4 [shape = 'f32[1,8]{1,0:T(1,128)}', space=vmem, size = 0x200, scoped, tag = 'scratch operand']
  #allocation5 [shape = 'f32[1,8]{1,0:T(1,128)}', space=vmem, size = 0x200, scoped, tag = 'scratch operand']
  %s0 = inlined_call_operand.vmem [shape: f32[10,8], index: 0, kind: input, shape index: {}]
  %s1 = inlined_call_operand.vmem [shape: s32[1,8], index: 1, kind: input, shape index: {}]
  %s2 = inlined_call_operand.hbm [shape: f32[1,1,1], index: 2, kind: output, shape index: {}]
  %s3 = sld [smem:[#allocation0]]
  $region30: #{tpu_custom_call.1} parent=0
    _
  %s5 = ssub.s32 1, %s3
  %s6 = scalar_select 0, %s5, %s3
  $region1: #{tpu_custom_call.1} parent=0
    #allocation6 [shape = 'u8[512]{0}', space=vmem, size = 0x400, scoped, tag = 'output window, operand 0, single buffered']
    #allocation7 [shape = 's32[1]{0}', space=sflag, size = 0x4, scoped, tag = 'scoped memory for tpu_custom_call.1']
    %7 = vsyncpa [#allocation7], 0
    // Predicated region
    $region2: #{tpu_custom_call.1} parent=1 // pred_check
      _
    $region3: #{tpu_custom_call.1} parent=1 // pred_check_branch
      %9 = sbr.rel (0) target = $region5
    $region4: #{tpu_custom_call.1} parent=1 // pred_region
      %s10 = sadd.s32 0, 0
      %p11 = scmp.lt.s32.totalorder %s10, 0
      %s12 = scalar_select %p11, %s10, 0
      %p13 = scmp.lt.s32.totalorder %s12, 0
      %s14 = scalar_select %p13, %s12, 0
      %s15 = smul.addr %s14, 8
      %s16 = scalar_lea.vmem %s0, %s15
      %s17 = sadd.s32 0, 0
      %p18 = scmp.lt.s32.totalorder %s17, 0
      %s19 = scalar_select %p18, %s17, 0
    $region5: #{tpu_custom_call.1} parent=1 // pred_fallthru
      _
    // Predicated region
    $region6: #{tpu_custom_call.1} parent=1 // pred_check
      _
    $region7: #{tpu_custom_call.1} parent=1 // pred_check_branch
      %21 = sbr.rel (0) target = $region9
    $region8: #{tpu_custom_call.1} parent=1 // pred_region
      %s22 = sadd.s32 0, 0
      %p23 = scmp.lt.s32.totalorder %s22, 0
      %s24 = scalar_select %p23, %s22, 0
      %p25 = scmp.lt.s32.totalorder %s24, 0
      %s26 = scalar_select %p25, %s24, 0
      %s27 = scalar_lea.vmem %s1, %s26
      %s28 = sadd.s32 0, 0
      %p29 = scmp.lt.s32.totalorder %s28, 0
      %s30 = scalar_select %p29, %s28, 0
    $region9: #{tpu_custom_call.1} parent=1 // pred_fallthru
      _
    %s31 = sadd.s32 0, 0
    %p32 = scmp.lt.s32.totalorder %s31, 0
    %s33 = scalar_select %p32, %s31, 0
    %p34 = scmp.lt.s32.totalorder %s33, 0
    %s35 = scalar_select %p34, %s33, 0
    %s36 = smul.addr %s35, 8
    %s37 = scalar_lea.vmem %s0, %s36
    %s38 = sadd.s32 0, 0
    %p39 = scmp.lt.s32.totalorder %s38, 0
    %s40 = scalar_select %p39, %s38, 0
    %p41 = scmp.lt.s32.totalorder %s40, 0
    %s42 = scalar_select %p41, %s40, 0
    %s43 = scalar_lea.vmem %s1, %s42
    %s44 = sadd.s32 0, 0
    %p45 = scmp.lt.s32.totalorder %s44, 0
    %s46 = scalar_select %p45, %s44, 0
    %p47 = scmp.lt.s32.totalorder %s46, 0
    %s48 = scalar_select %p47, %s46, 0
    %s49 = smul.addr %s48, 8
    %s50 = scalar_lea.vmem %s0, %s49
    %s51 = sadd.s32 0, 0
    %p52 = scmp.lt.s32.totalorder %s51, 0
    %s53 = scalar_select %p52, %s51, 0
    %s54 = sadd.s32 0, 0
    %p55 = scmp.lt.s32.totalorder %s54, 0
    %s56 = scalar_select %p55, %s54, 0
    %p57 = scmp.lt.s32.totalorder %s56, 0
    %s58 = scalar_select %p57, %s56, 0
    %s59 = scalar_lea.vmem %s1, %s58
    %s60 = sadd.s32 0, 0
    %p61 = scmp.lt.s32.totalorder %s60, 0
    %s62 = scalar_select %p61, %s60, 0
    %s63 = sadd.s32 0, 0
    %s64 = smul.u32 %s63, 8
    %p65 = scmp.eq.s32.totalorder 0, 0
    // Predicated region
    $region10: #{tpu_custom_call.1} parent=1 // pred_check
      %p66 = pneg %p65
    $region11: #{tpu_custom_call.1} parent=1 // pred_check_branch
      %68 = sbr.rel (%p66) target = $region13
    $region12: #{tpu_custom_call.1} parent=1 // pred_region
      %vm69 = vcmask 57344
      %70 = vst.msk [vmem:[#allocation4] sm:$0x1] %vm69, 0.0
      %71 = vst.msk [vmem:[#allocation5] sm:$0x1] %vm69, 0.0
      %v72 = vlaneseq
      %v73 = vshrl.u32 %v72, 7
      %v74 = vadd.s32 %v73, 8
      %vm75 = vcmask 64512
      %76 = vst.msk [vmem:[#allocation2] sm:$0xff] %vm75, %v73
      %vm77 = vcmask 58368
      %78 = vst.msk [vmem:[#allocation2 + $0x8] sm:$0x3] %vm77, %v74
      %v79 = vlaneseq
      %v80 = vand.u32 %v79, 127
      %81 = vst.msk [vmem:[#allocation3] sm:$0x1] %vm69, %v80
    $region13: #{tpu_custom_call.1} parent=1 // pred_fallthru
      _
    %p82 = scmp.lt.s32.totalorder %s64, 8
    // Predicated region
    $region14: #{tpu_custom_call.1} parent=1 // pred_check
      %p83 = pneg %p82
    $region15: #{tpu_custom_call.1} parent=1 // pred_check_branch
      %85 = sbr.rel (%p83) target = $region17
    $region16: #{tpu_custom_call.1} parent=1 // pred_region
      %v86 = vld [vmem:[%s50] sm:$0xff]
      %v87 = vld [vmem:[%s50 + $0x8] sm:$0x3]
      %v88 = vld [vmem:[%s59] sm:$0x1]
      %vm89 = vcmask 64512
      %v90 = vsel %vm89, %v86, -inf
      %vm91 = vcmask 58368
      %v92 = vsel %vm91, %v87, -inf
      %v93 = vmax.f32 %v90, %v92
      %v94 = vrot.slane %v93, 4
      %v95 = vmax.f32 %v93, %v94
      %v96 = vrot.slane %v95, 2
      %v97 = vmax.f32 %v95, %v96
      %v98 = vrot.slane %v97, 1
      %v99 = vmax.f32 %v97, %v98
      %v100 = vsub.f32 %v86, %v99
      %v101 = vsub.f32 %v87, %v99
      %v102 = vmul.f32 %v100, 1.442695
      %v103 = vpow.pop %v102
      %v104 = vmul.f32 %v101, 1.442695
      %v105 = vpow.pop %v104
      %v106 = vsel %vm89, %v103, 0.0
      %v107 = vsel %vm91, %v105, 0.0
      %v108 = vadd.f32 %v106, %v107
      %v109 = vrot.slane %v108, 4
      %v110 = vadd.f32 %v108, %v109
      %v111 = vrot.slane %v110, 2
      %v112 = vadd.f32 %v110, %v111
      %v113 = vrot.slane %v112, 1
      %v114 = vadd.f32 %v112, %v113
      %v115 = vlog2.pop %v114
      %v116 = vmul.f32 %v115, 0.6931472
      %v117 = vrcp.pop %v114
      %v118 = vld [vmem:[#allocation2] sm:$0xff]
      %v119 = vld [vmem:[#allocation2 + $0x8] sm:$0x3]
      %v120 = vlaneseq
      %v121 = vshrl.u32 %v120, 7
      %v122 = vsub.s32 0, %v121
      %v123 = vrot.slane %v88, %v122
      %vm124 = vcmp.eq.s32.totalorder %v118, %v123
      %vm125 = vcmp.eq.s32.totalorder %v119, %v123
      %v126 = vsel %vm124, %v100, 0.0
      %v127 = vsel %vm125, %v101, 0.0
      %v128 = vsel %vm89, %v126, 0.0
      %v129 = vsel %vm91, %v127, 0.0
      %v130 = vadd.f32 %v128, %v129
      %v131 = vrot.slane %v130, 4
      %v132 = vadd.f32 %v130, %v131
      %v133 = vrot.slane %v132, 2
      %v134 = vadd.f32 %v132, %v133
      %v135 = vrot.slane %v134, 1
      %v136 = vadd.f32 %v134, %v135
      %v137 = vsel %vm124, %v103, 0.0
      %v138 = vsel %vm125, %v105, 0.0
      %v139 = vsel %vm89, %v137, 0.0
      %v140 = vsel %vm91, %v138, 0.0
      %v141 = vadd.f32 %v139, %v140
      %v142 = vrot.slane %v141, 4
      %v143 = vadd.f32 %v141, %v142
      %v144 = vrot.slane %v143, 2
      %v145 = vadd.f32 %v143, %v144
      %v146 = vrot.slane %v145, 1
      %v147 = vadd.f32 %v145, %v146
      %v148 = vmul.f32 %v147, %v117
      %v149 = vsub.f32 %v136, %v116
      %v150 = vmul.f32 %v103, %v117
      %v151 = vmul.f32 %v105, %v117
      %v152 = vsub.f32 1.0, %v150
      %v153 = vsub.f32 1.0, %v151
      %v154 = vmax.f32 %v152, 0.0
      %v155 = vmax.f32 %v153, 0.0
      %v156 = vrsqrt.pop %v154
      %v157 = vmul.f32 %v154, %v156
      %vm158 = vcmp.eq.f32.partialorder %v154, inf
      %v159 = vsel %vm158, %v154, %v157
      %vm160 = vcmp.eq.f32.partialorder %v154, 0.0
      %v161 = vand.u32 %v154, 2147483648
      %v162 = vsel %vm160, %v161, %v159
      %v163 = vrsqrt.pop %v155
      %v164 = vmul.f32 %v155, %v163
      %vm165 = vcmp.eq.f32.partialorder %v155, inf
      %v166 = vsel %vm165, %v155, %v164
      %vm167 = vcmp.eq.f32.partialorder %v155, 0.0
      %v168 = vand.u32 %v155, 2147483648
      %v169 = vsel %vm167, %v168, %v166
      %v170 = vsel %vm89, %v162, 0.0
      %v171 = vsel %vm91, %v169, 0.0
      %v172 = vadd.f32 %v170, %v171
      %v173 = vrot.slane %v172, 4
      %v174 = vadd.f32 %v172, %v173
      %v175 = vrot.slane %v174, 2
      %v176 = vadd.f32 %v174, %v175
      %v177 = vrot.slane %v176, 1
      %v178 = vadd.f32 %v176, %v177
      %v179 = vmul.f32 %v116, %v178
      %v180 = vmul.f32 %v162, %v100
      %v181 = vmul.f32 %v169, %v101
      %v182 = vsel %vm89, %v180, 0.0
      %v183 = vsel %vm91, %v181, 0.0
      %v184 = vadd.f32 %v182, %v183
      %v185 = vrot.slane %v184, 4
      %v186 = vadd.f32 %v184, %v185
      %v187 = vrot.slane %v186, 2
      %v188 = vadd.f32 %v186, %v187
      %v189 = vrot.slane %v188, 1
      %v190 = vadd.f32 %v188, %v189
      %v191 = vsub.f32 %v179, %v190
      %v192 = vsub.f32 1.0, %v148
      %v193 = vmax.f32 %v192, 0.0
      %v194 = vrsqrt.pop %v193
      %v195 = vmul.f32 %v193, %v194
      %vm196 = vcmp.eq.f32.partialorder %v193, inf
      %v197 = vsel %vm196, %v193, %v195
      %vm198 = vcmp.eq.f32.partialorder %v193, 0.0
      %v199 = vand.u32 %v193, 2147483648
      %v200 = vsel %vm198, %v199, %v197
      %v201 = vmul.f32 %v200, %v149
      %v202 = vsub.f32 0.0, %v201
      %v203 = vrcp.pop %v191
      %v204 = vmul.f32 %v202, %v203
      %v205 = vld [vmem:[#allocation3] sm:$0x1]
      %s206 = ssub.s32 8, %s64
      %v207 = vstv %s206
      %vm208 = vcmp.lt.s32.totalorder %v205, %v207
      %v209 = vld [vmem:[#allocation4] sm:$0x1]
      %v210 = vsel %vm208, %v204, 0.0
      %v211 = vadd.f32 %v209, %v210
      %vm212 = vcmask 57344
      %213 = vst.msk [vmem:[#allocation4] sm:$0x1] %vm212, %v211
      %v214 = vld [vmem:[#allocation5] sm:$0x1]
      %v215 = vsel %vm208, %v192, 0.0
      %v216 = vadd.f32 %v214, %v215
      %217 = vst.msk [vmem:[#allocation5] sm:$0x1] %vm212, %v216
    $region17: #{tpu_custom_call.1} parent=1 // pred_fallthru
      _
    // Predicated region
    $region18: #{tpu_custom_call.1} parent=1 // pred_check
      %p218 = pneg %p65
    $region19: #{tpu_custom_call.1} parent=1 // pred_check_branch
      %220 = sbr.rel (%p218) target = $region21
    $region20: #{tpu_custom_call.1} parent=1 // pred_region
      %v221 = vld [vmem:[#allocation4] sm:$0x1]
      %vm222 = vcmask 57344
      %v223 = vsel %vm222, %v221, 0.0
      %224 = vadd.xlane.f32.xlu0 %v223
      %v225 = vpop.xlane.xlu0 %224
      %v226 = vld [vmem:[#allocation5] sm:$0x1]
      %v227 = vsel %vm222, %v226, 0.0
      %228 = vadd.xlane.f32.xlu0 %v227
      %v229 = vpop.xlane.xlu0 %228
      %v230 = vmul.f32 %v225, 0.125
      %v231 = vmul.f32 %v229, 0.125
      %v232 = vadd.f32 %v230, %v231
      %vm233 = vcmask 0
      %234 = vst.msk [vmem:[#allocation6] sm:$0x1] %vm233, %v232
    $region21: #{tpu_custom_call.1} parent=1 // pred_fallthru
      _
    // Predicated region
    $region22: #{tpu_custom_call.1} parent=1 // pred_check
      _
    $region23: #{tpu_custom_call.1} parent=1 // pred_check_branch
      %236 = sbr.rel (0) target = $region25
    $region24: #{tpu_custom_call.1} parent=1 // pred_region
      %s238 = ssub.s32 16, 16
      %239 = vsyncadd [#allocation7], %s238
      %s241 = sshll.u32 [#allocation6], 4
      %s242 = int_to_ptr.vmem [resolvable:$true] %s241
      %244 = dma.vmem_to_hbm [thread:$0]  %s242, 16, %s2, [#allocation7]
    $region25: #{tpu_custom_call.1} parent=1 // pred_fallthru
      _
    // Predicated region
    $region26: #{tpu_custom_call.1} parent=1 // pred_check
      _
    $region27: #{tpu_custom_call.1} parent=1 // pred_check_branch
      %246 = sbr.rel (0) target = $region29
    $region28: #{tpu_custom_call.1} parent=1 // pred_region
      %247 = dma.done [#allocation7], 16
    $region29: #{tpu_custom_call.1} parent=1 // pred_fallthru
      _
    %248 = vsyncpa [#allocation7], 1

</llo_original>
